<compile_context>
chip_gen: v7x
topology: tpu7x:2x2x1
jax: 0.10.0
libtpu: 0.0.40
codegen_flags: <defaults>
</compile_context>

<pallas_src>
import functools

import jax
import jax.numpy as jnp
from jax.experimental import pallas as pl
from jax.experimental.pallas import tpu as pltpu

# TODO(synk): stand-in for get_subconfig('losses').get('recon_lambda') (no config system here).
RECON_LAMBDA = 0.5


def _recon_loss_kernel(mask_ref, recon_ref, target_ref, out_ref, *,
                       img_w, huber_weight, n_inner, tile_images, n_img, needs_mask):
    """One grid step over a (tile_images, H*W) slab of flattened images.

    mask_ref   : (1, H*W) f32 edge mask (mse_weight on the (H-1, W-1) interior, 0 elsewhere)
    recon_ref  : (tile_images, H*W) input-dtype tile
    target_ref : (tile_images, H*W) input-dtype tile
    out_ref    : (1, 1, H*W) f32 resident output block == per-outer-core accumulator
    """
    i = pl.program_id(1)

    @pl.when(i == 0)
    def _():
        out_ref[...] = jnp.zeros_like(out_ref)

    t = target_ref[...].astype(jnp.float32)
    r = recon_ref[...].astype(jnp.float32)
    diff = r - t
    diff2 = diff * diff
    ad = jnp.abs(diff)

    hw = t.shape[-1]
    # Neighbour values via XLU rolls on the lane-dense flattened axis.
    # roll by hw-1  ==> value of t[h, w+1] lands at (h, w)
    # roll by hw-W  ==> value of t[h+1, w] lands at (h, w)
    # Wrap-around positions are killed by the precomputed edge mask.
    right = pltpu.roll(t, hw - 1, 1)
    down = pltpu.roll(t, hw - img_w, 1)
    grad_mag = jnp.abs(right - t) + jnp.abs(down - t)

    # smooth_l1 (beta=1): 0.5*d^2 if |d| < 1 else |d| - 0.5  (mean taken at finalize)
    huber = jnp.where(ad < 1.0, 0.5 * diff2, ad - 0.5)

    # Fused per-element contribution: mse_weight is folded into the edge mask.
    elem = mask_ref[...] * grad_mag * diff2
    if huber_weight == 1.0:
        elem = elem + huber
    else:
        elem = elem + jnp.float32(huber_weight) * huber

    if needs_mask:
        # Ragged last image block: select (not multiply) away rows past n_img so
        # unspecified out-of-bounds data cannot contribute (even if it is NaN/Inf).
        c = pl.program_id(0)
        img0 = (c * n_inner + i) * tile_images
        img_idx = jax.lax.broadcasted_iota(jnp.int32, (tile_images, 1), 0) + img0
        elem = jnp.where(img_idx < n_img, elem, 0.0)

    # Cheap sublane reduce into the resident accumulator; the cross-lane reduce
    # happens once, in the wrapper.
    out_ref[...] += jnp.sum(elem, axis=0, keepdims=True)[None]


def _choose_tile(n_img, hw, itemsize, budget_bytes):
    """Largest image-tile under the VMEM budget, preferring an exact divisor of n_img."""
    # Per image in a block: 2 inputs x 2 pipeline buffers (wire dtype)
    # + ~6 live full-tile f32 temporaries in the kernel body.
    per_img = hw * (4 * itemsize + 6 * 4)
    cap = max(1, budget_bytes // per_img)
    if cap >= n_img:
        return n_img                      # single block covers everything (common case)
    # Prefer a sublane-aligned divisor of n_img: no ragged block, masking compiles out.
    best = 0
    d = 8
    while d <= cap:
        if n_img % d == 0:
            best = d
        d += 8
    if best:
        return best
    # Fall back to a ragged sublane-aligned tile; the tail is masked in-kernel.
    return max(8, (cap // 8) * 8)


def reconstruction_loss(recon, target, recon_lambda=RECON_LAMBDA,
                        huber_weight=1.0, mse_weight=1.0, tile_images=None):
    """Equivalent of Reconstruction_Loss.forward(recon, target).

    recon, target: (B, C, H, W).  Returns a scalar f32.
    """
    assert recon.shape == target.shape
    b, c, h, w = recon.shape
    n_img = b * c
    hw = h * w
    n_total = n_img * hw

    # Free (contiguous) reshape to a lane-dense layout: one image per row.
    r2 = recon.reshape(n_img, hw)
    t2 = target.reshape(n_img, hw)

    itemsize = jnp.dtype(recon.dtype).itemsize
    budget = 24 * 1024 * 1024
    if tile_images is None:
        tile_images = _choose_tile(n_img, hw, itemsize, budget)
    else:
        tile_images = min(int(tile_images), n_img)
        if tile_images < n_img:
            tile_images = max(8, (tile_images // 8) * 8)   # sublane-aligned block rows

    n_blocks = pl.cdiv(n_img, tile_images)
    n_outer = 2 if (n_blocks % 2 == 0) else 1              # v7x: one output row per TensorCore
    n_inner = n_blocks // n_outer
    needs_mask = (n_blocks * tile_images) != n_img

    # Edge mask for the (H-1, W-1) interior (the F.pad row/col is zero) with
    # mse_weight folded in.  DMA'd once; block index is constant across the grid.
    idx = jnp.arange(hw, dtype=jnp.int32)
    col = idx % w
    row = idx // w
    edge = jnp.where((col < (w - 1)) & (row < (h - 1)),
                     jnp.float32(mse_weight), jnp.float32(0.0)).reshape(1, hw)

    kernel = functools.partial(
        _recon_loss_kernel,
        img_w=w,
        huber_weight=float(huber_weight),
        n_inner=int(n_inner),
        tile_images=int(tile_images),
        n_img=int(n_img),
        needs_mask=bool(needs_mask),
    )

    cost = pl.CostEstimate(
        flops=int(20 * n_total),
        transcendentals=0,
        bytes_accessed=int(2 * n_total * itemsize + hw * 4 + n_outer * hw * 4),
    )

    partials = pl.pallas_call(
        kernel,
        out_shape=jax.ShapeDtypeStruct((n_outer, 1, hw), jnp.float32),
        grid=(n_outer, n_inner),
        in_specs=[
            pl.BlockSpec((1, hw), lambda co, ii: (0, 0)),                           # edge mask
            pl.BlockSpec((tile_images, hw), lambda co, ii: (co * n_inner + ii, 0)),  # recon
            pl.BlockSpec((tile_images, hw), lambda co, ii: (co * n_inner + ii, 0)),  # target
        ],
        out_specs=pl.BlockSpec((1, 1, hw), lambda co, ii: (co, 0, 0)),
        compiler_params=pltpu.CompilerParams(
            dimension_semantics=("parallel", "arbitrary"),
            vmem_limit_bytes=48 * 1024 * 1024,
        ),
        cost_estimate=cost,
    )(edge, r2, t2)

    final_scale = float(recon_lambda) / float(n_total)
    return jnp.sum(partials) * jnp.float32(final_scale)


def _reference(recon, target, recon_lambda, huber_weight, mse_weight):
    """Pure-JAX transcription of the PyTorch forward."""
    t = target.astype(jnp.float32)
    r = recon.astype(jnp.float32)
    grad_y = jnp.abs(t[:, :, 1:, :] - t[:, :, :-1, :])
    grad_x = jnp.abs(t[:, :, :, 1:] - t[:, :, :, :-1])
    grad_y = grad_y[:, :, :, :-1]
    grad_x = grad_x[:, :, :-1, :]
    grad_mag = grad_x + grad_y
    weight_map = jnp.pad(grad_mag, ((0, 0), (0, 0), (0, 1), (0, 1)))
    weighted_mse = jnp.mean(weight_map * (r - t) ** 2)
    d = r - t
    ad = jnp.abs(d)
    huber = jnp.mean(jnp.where(ad < 1.0, 0.5 * d * d, ad - 0.5))
    return (mse_weight * weighted_mse + huber_weight * huber) * recon_lambda


if __name__ == "__main__":
    key = jax.random.PRNGKey(0)
    k_recon, k_target = jax.random.split(key)

    B, C, H, W = 2, 4, 16, 16  # small shapes consistent with the module
    recon = jax.random.normal(k_recon, (B, C, H, W), dtype=jnp.float32)
    target = jax.random.normal(k_target, (B, C, H, W), dtype=jnp.float32)

    loss = reconstruction_loss(recon, target)
    jax.block_until_ready(loss)

    ref = _reference(recon, target, RECON_LAMBDA, 1.0, 1.0)
    assert jnp.allclose(loss, ref, atol=1e-5, rtol=1e-5), (loss, ref)

    print("KERNEL_OK")
</pallas_src>

<mosaic_0001>
module attributes {stable_mosaic.version = 11 : i64} {
  func.func @_recon_loss_kernel(%arg0: i32, %arg1: i32, %arg2: memref<1x256xf32, #tpu.memory_space<vmem>>, %arg3: memref<8x256xf32, #tpu.memory_space<vmem>>, %arg4: memref<8x256xf32, #tpu.memory_space<vmem>>, %arg5: memref<1x1x256xf32, #tpu.memory_space<vmem>>) attributes {dimension_semantics = [#tpu.dimension_semantics<parallel>, #tpu.dimension_semantics<arbitrary>], iteration_bounds = array<i64: 1, 1>, scalar_prefetch = 0 : i64, scratch_operands = 0 : i64, tpu.core_type = #tpu.core_type<tc>, window_params = [{pipeline_mode = #tpu.pipeline_mode<synchronous>, transform_indices = @transform_0, window_bounds = array<i64: 1, 256>}, {transform_indices = @transform_1, window_bounds = array<i64: 8, 256>}, {transform_indices = @transform_2, window_bounds = array<i64: 8, 256>}, {transform_indices = @transform_3, window_bounds = array<i64: 1, 1, 256>}]} {
    %c0_i32 = arith.constant 0 : i32
    %0 = arith.cmpi eq, %arg1, %c0_i32 : i32
    %1 = arith.extui %0 : i1 to i32
    %c0_i32_0 = arith.constant 0 : i32
    %2 = arith.cmpi ne, %1, %c0_i32_0 : i32
    scf.if %2 {
      %cst_15 = arith.constant 0.000000e+00 : f32
      %33 = vector.broadcast %cst_15 : f32 to vector<1x1x256xf32>
      %c0_16 = arith.constant 0 : index
      %c0_17 = arith.constant 0 : index
      %c0_18 = arith.constant 0 : index
      %34 = vector.load %arg5[%c0_16, %c0_17, %c0_18] : memref<1x1x256xf32, #tpu.memory_space<vmem>>, vector<1x1x256xf32>
      tpu.vector_store %arg5[%c0_16, %c0_17, %c0_18], %33 {strides = array<i32>} : memref<1x1x256xf32, #tpu.memory_space<vmem>>, vector<1x1x256xf32>,
    } else {
    }
    %c0 = arith.constant 0 : index
    %c0_1 = arith.constant 0 : index
    %3 = vector.load %arg4[%c0, %c0_1] : memref<8x256xf32, #tpu.memory_space<vmem>>, vector<8x256xf32>
    %c0_2 = arith.constant 0 : index
    %c0_3 = arith.constant 0 : index
    %4 = vector.load %arg3[%c0_2, %c0_3] : memref<8x256xf32, #tpu.memory_space<vmem>>, vector<8x256xf32>
    %5 = arith.subf %4, %3 : vector<8x256xf32>
    %6 = arith.mulf %5, %5 : vector<8x256xf32>
    %7 = math.absf %5 : vector<8x256xf32>
    %c255_i32 = arith.constant 255 : i32
    %8 = tpu.dynamic_rotate %3 by %c255_i32 dim 1 : vector<8x256xf32>, i32 -> vector<8x256xf32>
    %c240_i32 = arith.constant 240 : i32
    %9 = tpu.dynamic_rotate %3 by %c240_i32 dim 1 : vector<8x256xf32>, i32 -> vector<8x256xf32>
    %10 = arith.subf %8, %3 : vector<8x256xf32>
    %11 = math.absf %10 : vector<8x256xf32>
    %12 = arith.subf %9, %3 : vector<8x256xf32>
    %13 = math.absf %12 : vector<8x256xf32>
    %14 = arith.addf %11, %13 : vector<8x256xf32>
    %cst = arith.constant 1.000000e+00 : f32
    %15 = vector.broadcast %cst : f32 to vector<8x256xf32>
    %16 = arith.cmpf olt, %7, %15 : vector<8x256xf32>
    %cst_4 = arith.constant 5.000000e-01 : f32
    %17 = vector.broadcast %cst_4 : f32 to vector<8x256xf32>
    %18 = arith.mulf %17, %6 : vector<8x256xf32>
    %cst_5 = arith.constant 5.000000e-01 : f32
    %19 = vector.broadcast %cst_5 : f32 to vector<8x256xf32>
    %20 = arith.subf %7, %19 : vector<8x256xf32>
    %21 = arith.select %16, %18, %20 : vector<8x256xi1>, vector<8x256xf32>
    %c0_6 = arith.constant 0 : index
    %c0_7 = arith.constant 0 : index
    %22 = vector.load %arg2[%c0_6, %c0_7] : memref<1x256xf32, #tpu.memory_space<vmem>>, vector<1x256xf32>
    %23 = vector.broadcast %22 : vector<1x256xf32> to vector<8x256xf32>
    %24 = arith.mulf %23, %14 : vector<8x256xf32>
    %25 = arith.mulf %24, %6 : vector<8x256xf32>
    %26 = arith.addf %25, %21 : vector<8x256xf32>
    %c0_8 = arith.constant 0 : index
    %c0_9 = arith.constant 0 : index
    %c0_10 = arith.constant 0 : index
    %27 = vector.load %arg5[%c0_8, %c0_9, %c0_10] : memref<1x1x256xf32, #tpu.memory_space<vmem>>, vector<1x1x256xf32>
    %cst_11 = arith.constant dense<0.000000e+00> : vector<256xf32>
    %28 = vector.multi_reduction <add>, %26, %cst_11 [0] : vector<8x256xf32> to vector<256xf32>
    %29 = vector.shape_cast %28 : vector<256xf32> to vector<1x256xf32>
    %30 = vector.shape_cast %29 : vector<1x256xf32> to vector<1x1x256xf32>
    %31 = arith.addf %27, %30 : vector<1x1x256xf32>
    %c0_12 = arith.constant 0 : index
    %c0_13 = arith.constant 0 : index
    %c0_14 = arith.constant 0 : index
    %32 = vector.load %arg5[%c0_12, %c0_13, %c0_14] : memref<1x1x256xf32, #tpu.memory_space<vmem>>, vector<1x1x256xf32>
    tpu.vector_store %arg5[%c0_12, %c0_13, %c0_14], %31 {strides = array<i32>} : memref<1x1x256xf32, #tpu.memory_space<vmem>>, vector<1x1x256xf32>,
    return
  }
  func.func @transform_0(%arg0: i32, %arg1: i32) -> (i32, i32) {
    %c0_i32 = arith.constant 0 : i32
    %c0_i32_0 = arith.constant 0 : i32
    %c0_i32_1 = arith.constant 0 : i32
    return %c0_i32, %c0_i32_0 : i32, i32
  }
  func.func @transform_1(%arg0: i32, %arg1: i32) -> (i32, i32) {
    %c1_i32 = arith.constant 1 : i32
    %0 = arith.muli %arg0, %c1_i32 : i32
    %1 = arith.addi %0, %arg1 : i32
    %c0_i32 = arith.constant 0 : i32
    %c0_i32_0 = arith.constant 0 : i32
    return %1, %c0_i32 : i32, i32
  }
  func.func @transform_2(%arg0: i32, %arg1: i32) -> (i32, i32) {
    %c1_i32 = arith.constant 1 : i32
    %0 = arith.muli %arg0, %c1_i32 : i32
    %1 = arith.addi %0, %arg1 : i32
    %c0_i32 = arith.constant 0 : i32
    %c0_i32_0 = arith.constant 0 : i32
    return %1, %c0_i32 : i32, i32
  }
  func.func @transform_3(%arg0: i32, %arg1: i32) -> (i32, i32, i32) {
    %c0_i32 = arith.constant 0 : i32
    %c0_i32_0 = arith.constant 0 : i32
    %c0_i32_1 = arith.constant 0 : i32
    return %arg0, %c0_i32, %c0_i32_0 : i32, i32, i32
  }
}

</mosaic_0001>

<llo_original>
// kernel: tpu_custom_call.1
$region0: #{tpu_custom_call.1}
  #allocation0 [shape = 'u32[]', space=smem, size = 0x4, offset = 0x4, fixed_abs, tag = 'smem constant byte address 0x4 - core index']
  #allocation1 [shape = 'u32[144,128]{1,0:T(1,128)}', space=vmem, size = 0x12000, scoped, tag = 'internal scratch']
  %s0 = inlined_call_operand.hbm [shape: f32[1,256], index: 0, kind: input, shape index: {}]
  %s1 = inlined_call_operand.hbm [shape: f32[8,256], index: 1, kind: input, shape index: {}]
  %s2 = inlined_call_operand.hbm [shape: f32[8,256], index: 2, kind: input, shape index: {}]
  %s3 = inlined_call_operand.hbm [shape: f32[1,1,256], index: 3, kind: output, shape index: {}]
  %s4 = sld [smem:[#allocation0]]
  $region38: #{tpu_custom_call.1} parent=0
    _
  %s6 = ssub.s32 1, %s4
  %s7 = scalar_select 0, %s6, %s4
  $region1: #{tpu_custom_call.1} parent=0
    #allocation2 [shape = 'u8[1024]{0}', space=vmem, size = 0x400, scoped, tag = 'input window, operand 0, single buffered']
    #allocation3 [shape = 's32[1]{0}', space=sflag, size = 0x4, scoped, tag = 'scoped memory for tpu_custom_call.1']
    #allocation4 [shape = 's32[1]{0}', space=sflag, size = 0x4, scoped, tag = 'scoped memory for tpu_custom_call.1']
    #allocation5 [shape = 'u8[8192]{0}', space=vmem, size = 0x2000, scoped, tag = 'input window, operand 1, single buffered']
    #allocation6 [shape = 's32[1]{0}', space=sflag, size = 0x4, scoped, tag = 'scoped memory for tpu_custom_call.1']
    #allocation7 [shape = 'u8[8192]{0}', space=vmem, size = 0x2000, scoped, tag = 'input window, operand 2, single buffered']
    #allocation8 [shape = 'u8[1024]{0}', space=vmem, size = 0x400, scoped, tag = 'output window, operand 0, single buffered']
    %8 = vsyncpa [#allocation3], 0
    %9 = vsyncpa [#allocation6], 0
    %10 = vsyncpa [#allocation4], 0
    // Predicated region
    $region2: #{tpu_custom_call.1} parent=1 // pred_check
      _
    $region3: #{tpu_custom_call.1} parent=1 // pred_check_branch
      %12 = sbr.rel (0) target = $region5
    $region4: #{tpu_custom_call.1} parent=1 // pred_region
      %s14 = ssub.s32 32, 32
      %15 = vsyncadd [#allocation3], %s14
      %s17 = sshll.u32 [#allocation2], 4
      %s18 = int_to_ptr.vmem [resolvable:$true] %s17
      %20 = dma.hbm_to_vmem [thread:$0]  %s0, 32, %s18, [#allocation3]
    $region5: #{tpu_custom_call.1} parent=1 // pred_fallthru
      _
    // Predicated region
    $region6: #{tpu_custom_call.1} parent=1 // pred_check
      _
    $region7: #{tpu_custom_call.1} parent=1 // pred_check_branch
      %22 = sbr.rel (0) target = $region9
    $region8: #{tpu_custom_call.1} parent=1 // pred_region
      %s23 = sadd.s32 0, 0
      %s25 = ssub.s32 256, 256
      %26 = vsyncadd [#allocation6], %s25
      %s27 = smul.addr %s23, 2
      %s28 = smul.addr %s27, 128
      %s29 = scalar_lea.hbm %s1, %s28
      %s31 = sshll.u32 [#allocation5], 4
      %s32 = int_to_ptr.vmem [resolvable:$true] %s31
      %34 = dma.hbm_to_vmem [thread:$0]  %s29, 256, %s32, [#allocation6]
    $region9: #{tpu_custom_call.1} parent=1 // pred_fallthru
      _
    // Predicated region
    $region10: #{tpu_custom_call.1} parent=1 // pred_check
      _
    $region11: #{tpu_custom_call.1} parent=1 // pred_check_branch
      %36 = sbr.rel (0) target = $region13
    $region12: #{tpu_custom_call.1} parent=1 // pred_region
      %s37 = sadd.s32 0, 0
      %s39 = ssub.s32 256, 256
      %40 = vsyncadd [#allocation6], %s39
      %s41 = smul.addr %s37, 2
      %s42 = smul.addr %s41, 128
      %s43 = scalar_lea.hbm %s2, %s42
      %s45 = sshll.u32 [#allocation7], 4
      %s46 = int_to_ptr.vmem [resolvable:$true] %s45
      %48 = dma.hbm_to_vmem [thread:$0]  %s43, 256, %s46, [#allocation6]
    $region13: #{tpu_custom_call.1} parent=1 // pred_fallthru
      _
    // Predicated region
    $region14: #{tpu_custom_call.1} parent=1 // pred_check
      _
    $region15: #{tpu_custom_call.1} parent=1 // pred_check_branch
      %50 = sbr.rel (0) target = $region17
    $region16: #{tpu_custom_call.1} parent=1 // pred_region
      %51 = dma.done [#allocation3], 32
    $region17: #{tpu_custom_call.1} parent=1 // pred_fallthru
      _
    // Predicated region
    $region18: #{tpu_custom_call.1} parent=1 // pred_check
      _
    $region19: #{tpu_custom_call.1} parent=1 // pred_check_branch
      %53 = sbr.rel (0) target = $region21
    $region20: #{tpu_custom_call.1} parent=1 // pred_region
      %54 = dma.done [#allocation6], 256
    $region21: #{tpu_custom_call.1} parent=1 // pred_fallthru
      _
    // Predicated region
    $region22: #{tpu_custom_call.1} parent=1 // pred_check
      _
    $region23: #{tpu_custom_call.1} parent=1 // pred_check_branch
      %56 = sbr.rel (0) target = $region25
    $region24: #{tpu_custom_call.1} parent=1 // pred_region
      %57 = dma.done [#allocation6], 256
    $region25: #{tpu_custom_call.1} parent=1 // pred_fallthru
      _
    %s58 = sadd.s32 0, 0
    %s59 = sadd.s32 0, 0
    %p60 = scmp.eq.s32.totalorder 0, 0
    // Predicated region
    $region26: #{tpu_custom_call.1} parent=1 // pred_check
      %p61 = pneg %p60
    $region27: #{tpu_custom_call.1} parent=1 // pred_check_branch
      %63 = sbr.rel (%p61) target = $region29
    $region28: #{tpu_custom_call.1} parent=1 // pred_region
      %v64 = vlaneseq
      %vm65 = vcmp.ge.s32.totalorder %v64, 0
      %vm66 = vcmp.lt.s32.totalorder %v64, 256
      %vm67 = vmand %vm65, %vm66
      %68 = vst.msk [vmem:[#allocation8] sm:$0x3] %vm67, 0.0
    $region29: #{tpu_custom_call.1} parent=1 // pred_fallthru
      _
    %v69 = vld [vmem:[#allocation7] sm:$0xff]
    %v70 = vld [vmem:[#allocation7 + $0x8] sm:$0xff]
    %v71 = vld [vmem:[#allocation5] sm:$0xff]
    %v72 = vld [vmem:[#allocation5 + $0x8] sm:$0xff]
    %v73 = vsub.f32 %v71, %v69
    %v74 = vsub.f32 %v72, %v70
    %v75 = vmul.f32 %v73, %v73
    %v76 = vmul.f32 %v74, %v74
    %v77 = vand.u32 2147483647, %v73
    %v78 = vand.u32 2147483647, %v74
    %79 = vrot.lane.b32.xlu0 %v69, 127
    %v80 = vpop.permute.xlu0 %79
    %81 = vrot.lane.b32.xlu0 %v70, 127
    %v82 = vpop.permute.xlu0 %81
    %v83 = vlaneseq
    %v84 = vand.u32 %v83, 127
    %vm85 = vcmp.lt.s32.totalorder %v84, 127
    %v86 = vsel %vm85, %v80, %v82
    %v87 = vsel %vm85, %v82, %v80
    %88 = vrot.lane.b32.xlu0 %v69, 112
    %v89 = vpop.permute.xlu0 %88
    %90 = vrot.lane.b32.xlu0 %v70, 112
    %v91 = vpop.permute.xlu0 %90
    %vm92 = vcmp.lt.s32.totalorder %v84, 112
    %v93 = vsel %vm92, %v89, %v91
    %v94 = vsel %vm92, %v91, %v89
    %v95 = vsub.f32 %v86, %v69
    %v96 = vsub.f32 %v87, %v70
    %v97 = vand.u32 2147483647, %v95
    %v98 = vand.u32 2147483647, %v96
    %v99 = vsub.f32 %v93, %v69
    %v100 = vsub.f32 %v94, %v70
    %v101 = vand.u32 2147483647, %v99
    %v102 = vand.u32 2147483647, %v100
    %v103 = vadd.f32 %v97, %v101
    %v104 = vadd.f32 %v98, %v102
    %vm105 = vcmp.lt.f32.partialorder %v77, 1.0
    %vm106 = vcmp.lt.f32.partialorder %v78, 1.0
    %v107 = vmul.f32 %v75, 0.5
    %v108 = vmul.f32 %v76, 0.5
    %v109 = vsub.f32 %v77, 0.5
    %v110 = vsub.f32 %v78, 0.5
    %v111 = vsel %vm105, %v107, %v109
    %v112 = vsel %vm106, %v108, %v110
    %v113 = vld [vmem:[#allocation2] sm:$0x3]
    %v115 = vlaneseq
    %v116 = vshrl.u32 %v115, 7
    %v117 = vsub.s32 0, %v116
    %v118 = vrot.slane %v113, %v117
    %v119 = vlaneseq
    %v120 = vshrl.u32 %v119, 7
    %v121 = vsub.s32 1, %v120
    %v122 = vrot.slane %v113, %v121
    %v125 = vmul.f32 %v118, %v103
    %v126 = vmul.f32 %v122, %v104
    %v127 = vmul.f32 %v125, %v75
    %v128 = vmul.f32 %v126, %v76
    %v129 = vadd.f32 %v127, %v111
    %v130 = vadd.f32 %v128, %v112
    %v131 = vld [vmem:[#allocation8] sm:$0x3]
    %v132 = vrot.slane %v129, 4
    %v133 = vadd.f32 %v129, %v132
    %v134 = vrot.slane %v133, 2
    %v135 = vadd.f32 %v133, %v134
    %v136 = vrot.slane %v135, 1
    %v137 = vadd.f32 %v135, %v136
    %v138 = vrot.slane %v130, 4
    %v139 = vadd.f32 %v130, %v138
    %v140 = vrot.slane %v139, 2
    %v141 = vadd.f32 %v139, %v140
    %v142 = vrot.slane %v141, 1
    %v143 = vadd.f32 %v141, %v142
    %v146 = vcombine.low %v137, %v143
    %v148 = vunpack.c.l.s4 1966171168
    %v149 = vunpack.c.0.s8 %v148
    %v150 = vlaneseq
    %v151 = vshrl.u32 %v150, 7
    %v152 = vsub.s32 %v149, %v151
    %v153 = vrot.slane %v146, %v152
    %v155 = vunpack.c.l.s4 1966171168
    %v156 = vunpack.c.0.s8 %v155
    %v157 = vlaneseq
    %v158 = vshrl.u32 %v157, 7
    %v159 = vsub.s32 %v156, %v158
    %v160 = vrot.slane %v153, %v159
    %v162 = vadd.f32 %v131, %v160
    %v163 = vlaneseq
    %vm164 = vcmp.ge.s32.totalorder %v163, 0
    %vm165 = vcmp.lt.s32.totalorder %v163, 256
    %vm166 = vmand %vm164, %vm165
    %167 = vst.msk [vmem:[#allocation8] sm:$0x3] %vm166, %v162
    // Predicated region
    $region30: #{tpu_custom_call.1} parent=1 // pred_check
      _
    $region31: #{tpu_custom_call.1} parent=1 // pred_check_branch
      %169 = sbr.rel (0) target = $region33
    $region32: #{tpu_custom_call.1} parent=1 // pred_region
      %s171 = ssub.s32 32, 32
      %172 = vsyncadd [#allocation4], %s171
      %s174 = sshll.u32 [#allocation8], 4
      %s175 = int_to_ptr.vmem [resolvable:$true] %s174
      %177 = dma.vmem_to_hbm [thread:$0]  %s175, 32, %s3, [#allocation4]
    $region33: #{tpu_custom_call.1} parent=1 // pred_fallthru
      _
    // Predicated region
    $region34: #{tpu_custom_call.1} parent=1 // pred_check
      _
    $region35: #{tpu_custom_call.1} parent=1 // pred_check_branch
      %179 = sbr.rel (0) target = $region37
    $region36: #{tpu_custom_call.1} parent=1 // pred_region
      %180 = dma.done [#allocation4], 32
    $region37: #{tpu_custom_call.1} parent=1 // pred_fallthru
      _
    %181 = vsyncpa [#allocation3], 1
    %182 = vsyncpa [#allocation6], 1
    %183 = vsyncpa [#allocation4], 1

</llo_original>
